<compile_context>
chip_gen: v6e
topology: v6e:2x2x1
jax: 0.10.0
libtpu: 0.0.40
codegen_flags: <defaults>
</compile_context>

<pallas_src>
import functools

import jax
import jax.numpy as jnp
from jax import lax
from jax.experimental import pallas as pl
from jax.experimental.pallas import tpu as pltpu

LANE = 128
SUBLANE = 8


def _combo_partial_kernel(p_ref, t_ref, out_ref, *, tile_rows, rows,
                          needs_mask, binary_target, use_mxu):
    p_raw = p_ref[...].astype(jnp.float32)
    t_raw = t_ref[...].astype(jnp.float32)

    def emit(p, t):
        if binary_target:
            # t is exactly 0/1: one log instead of two.  Masked/padded rows have
            # p = t = 0 -> sel = 1 -> log = 0 -> zero contribution.
            sel = jnp.where(t != 0.0, p, 1.0 - p)
            nbce = jnp.maximum(jnp.log(sel), -100.0)          # == -bce
        else:
            # PyTorch F.binary_cross_entropy clamps each log term at -100.
            log_p = jnp.maximum(jnp.log(p), -100.0)
            log_1mp = jnp.maximum(jnp.log1p(-p), -100.0)
            nbce = log_1mp + t * (log_p - log_1mp)            # == -bce

        if use_mxu:
            # Offload the row-sums to the (otherwise idle) MXU slot:
            # (8, tr) @ (tr, 128) -> (8, 128).  Each sublane holds
            # 0.125 * column-sum (0.125 is exact in bf16/f32), so the wrapper's
            # sum over the 8 sublanes reproduces the column sums exactly.
            wgt = jnp.full((SUBLANE, tile_rows), 0.125, dtype=jnp.float32)

            def red(x):
                return jnp.dot(wgt, x,
                               preferred_element_type=jnp.float32,
                               precision=jax.lax.Precision.HIGHEST)
        else:
            k = tile_rows // SUBLANE

            def red(x):
                # (tr,128) -> (k,8,128); sum over leading axis is pure VPU.
                return x.reshape(k, SUBLANE, LANE).sum(axis=0)

        out_ref[0, 0, :, :] = red(t)
        out_ref[0, 1, :, :] = red(p)
        out_ref[0, 2, :, :] = red(p * t)
        out_ref[0, 3, :, :] = red(nbce)
        out_ref[0, 4, :, :] = red(t * nbce)

    if needs_mask:
        last = pl.num_programs(0) - 1

        @pl.when(pl.program_id(0) == last)
        def _():
            # Rows past `rows` in the last block are uninitialized VMEM.  Mask
            # the INPUTS (before any log) so they contribute exactly 0.
            valid = rows % tile_rows
            row_id = lax.broadcasted_iota(jnp.int32, (tile_rows, LANE), 0)
            keep = row_id < valid
            emit(jnp.where(keep, p_raw, 0.0), jnp.where(keep, t_raw, 0.0))

        @pl.when(pl.program_id(0) != last)
        def _():
            emit(p_raw, t_raw)
    else:
        emit(p_raw, t_raw)


def combo_loss_batch(inp, target, *, tile_rows=2048):
    """ComboLoss_batch.forward.  inp: (N,1,H,W) probabilities, target: (N,H,W)."""
    n, c, h, w = inp.shape
    assert c == 1, "BatchDiceLoss's flat broadcast requires a single channel"
    assert target.shape == (n, h, w)

    binary_target = (target.dtype == jnp.bool_ or
                     jnp.issubdtype(target.dtype, jnp.integer))

    # Keep target narrow through the DMA; cast to f32 inside the kernel.
    if target.dtype == jnp.bool_:
        target = target.astype(jnp.int8)
    elif target.dtype == jnp.int64:
        target = target.astype(jnp.int32)
    elif target.dtype == jnp.float64:
        target = target.astype(jnp.float32)
    if inp.dtype == jnp.float64:
        inp = inp.astype(jnp.float32)

    m = n * h * w
    p = inp.reshape(-1)       # free reshape (no copy)
    t = target.reshape(-1)    # free reshape (no copy)

    rows = pl.cdiv(m, LANE)
    if m % LANE != 0:
        # Rare path: element count not lane-aligned -> zero-pad the flat tail
        # (padded zeros contribute exactly 0 to every partial sum).
        pad = rows * LANE - m
        p = jnp.pad(p, (0, pad))
        t = jnp.pad(t, (0, pad))
    p2d = p.reshape(rows, LANE)
    t2d = t.reshape(rows, LANE)

    # Tile rows: multiple of 32 (native sublane tiling even for int8 targets),
    # as big as tile_rows but never wildly larger than the data.
    def _round32(x):
        return max(32, ((x + 31) // 32) * 32)

    tr = min(_round32(tile_rows), _round32(rows))
    # v7x megacore: keep >= 2 blocks on the "parallel" grid axis when possible.
    if rows > 32 and pl.cdiv(rows, tr) < 2:
        tr = _round32(pl.cdiv(rows, 2))
    num_blocks = pl.cdiv(rows, tr)
    needs_mask = (rows % tr) != 0
    use_mxu = (tr % 128 == 0)   # MXU row-sum offload only for clean K tiles

    kernel = functools.partial(
        _combo_partial_kernel, tile_rows=tr, rows=rows,
        needs_mask=needs_mask, binary_target=binary_target, use_mxu=use_mxu)

    partials = pl.pallas_call(
        kernel,
        out_shape=jax.ShapeDtypeStruct((num_blocks, 5, SUBLANE, LANE),
                                       jnp.float32),
        grid_spec=pltpu.PrefetchScalarGridSpec(
            num_scalar_prefetch=0,
            grid=(num_blocks,),
            in_specs=[
                pl.BlockSpec((tr, LANE), lambda i: (i, 0)),
                pl.BlockSpec((tr, LANE), lambda i: (i, 0)),
            ],
            out_specs=pl.BlockSpec((1, 5, SUBLANE, LANE),
                                   lambda i: (i, 0, 0, 0)),
        ),
        compiler_params=pltpu.CompilerParams(
            dimension_semantics=("parallel",),   # each step owns its output slot
            vmem_limit_bytes=48 * 1024 * 1024),
    )(p2d, t2d)

    # Tiny wrapper-side reduce + scalar combine (negligible vs. streamed read).
    sums = jnp.sum(partials, axis=(0, 2, 3))  # (5,)
    sum_t, sum_p, sum_pt = sums[0], sums[1], sums[2]
    sum_nbce, sum_tnbce = sums[3], sums[4]     # sums of -bce and -t*bce

    mf = jnp.float32(m)
    # WeightedBCELoss: beta = 1 - mean(target); weights = (1-beta) + (2*beta-1)*t
    # mean(weights * bce) with bce = -nbce  =>  flip the sign of the sums.
    beta = 1.0 - sum_t / mf
    loss1 = -((1.0 - beta) * sum_nbce + (2.0 * beta - 1.0) * sum_tnbce) / mf

    # BatchDiceLoss (smooth = 1)
    smooth = 1.0
    loss2 = 1.0 - 2.0 * (sum_pt + smooth) / (sum_p + sum_t + smooth)

    return jnp.reshape(10.0 * loss1 + loss2, (1,))  # PyTorch output shape (1,)


def _reference(inp, target):
    """Pure-JAX reference mirroring the PyTorch module."""
    t = target.astype(jnp.float32)
    p_bce = inp[:, 0, :, :].astype(jnp.float32)
    beta = 1.0 - jnp.mean(t)
    weights = 1.0 - beta + (2.0 * beta - 1.0) * t
    log_p = jnp.maximum(jnp.log(p_bce), -100.0)
    log_1mp = jnp.maximum(jnp.log1p(-p_bce), -100.0)
    bce = -(t * log_p + (1.0 - t) * log_1mp)
    loss1 = jnp.mean(weights * bce)

    p_flat = inp.astype(jnp.float32).reshape(1, -1)
    t_flat = t.reshape(1, -1)
    smooth = 1.0
    inter = jnp.sum(p_flat * t_flat, axis=1)
    dice = 2.0 * (inter + smooth) / (jnp.sum(p_flat, axis=1) +
                                     jnp.sum(t_flat, axis=1) + smooth)
    loss2 = 1.0 - dice
    return 10.0 * loss1 + loss2


if __name__ == "__main__":
    key = jax.random.PRNGKey(0)

    def make(shape, k):
        k1, k2 = jax.random.split(k)
        # Probabilities in (0,1) as required by binary_cross_entropy; binary targets.
        inp = jax.random.uniform(k1, shape, dtype=jnp.float32,
                                 minval=0.01, maxval=0.99)
        tgt_bool = jax.random.uniform(k2, (shape[0], shape[2], shape[3])) > 0.5
        return inp, tgt_bool

    keys = jax.random.split(key, 4)

    # 1) small, float targets (VPU reduction path, ragged last block masked)
    inp1, tb1 = make((2, 1, 16, 16), keys[0])
    t1 = tb1.astype(jnp.float32)
    out1 = jax.block_until_ready(combo_loss_batch(inp1, t1))
    ref1 = _reference(inp1, t1)
    assert out1.shape == (1,)
    assert jnp.allclose(out1, ref1, rtol=1e-4, atol=1e-5), (out1, ref1)

    # 2) medium, float targets (MXU row-sum path, 2 parallel blocks, no mask)
    inp2, tb2 = make((2, 1, 128, 256), keys[1])
    t2 = tb2.astype(jnp.float32)
    out2 = jax.block_until_ready(combo_loss_batch(inp2, t2))
    ref2 = _reference(inp2, t2)
    assert jnp.allclose(out2, ref2, rtol=1e-4, atol=1e-5), (out2, ref2)

    # 3) small, boolean targets (single-log binary fast path, int8 DMA)
    inp3, tb3 = make((2, 1, 16, 16), keys[2])
    out3 = jax.block_until_ready(combo_loss_batch(inp3, tb3))
    ref3 = _reference(inp3, tb3.astype(jnp.float32))
    assert jnp.allclose(out3, ref3, rtol=1e-4, atol=1e-5), (out3, ref3)

    # 4) non-lane-aligned element count (flat zero-pad tail path)
    inp4, tb4 = make((1, 1, 13, 9), keys[3])
    t4 = tb4.astype(jnp.float32)
    out4 = jax.block_until_ready(combo_loss_batch(inp4, t4))
    ref4 = _reference(inp4, t4)
    assert jnp.allclose(out4, ref4, rtol=1e-4, atol=1e-5), (out4, ref4)

    print("KERNEL_OK")
</pallas_src>

<mosaic_0001>
module attributes {stable_mosaic.version = 11 : i64} {
  func.func @_combo_partial_kernel(%arg0: i32, %arg1: memref<32x128xf32, #tpu.memory_space<vmem>>, %arg2: memref<32x128xf32, #tpu.memory_space<vmem>>, %arg3: memref<1x5x8x128xf32, #tpu.memory_space<vmem>>) attributes {dimension_semantics = [#tpu.dimension_semantics<parallel>], iteration_bounds = array<i64: 1>, scalar_prefetch = 0 : i64, scratch_operands = 0 : i64, tpu.core_type = #tpu.core_type<tc>, window_params = [{transform_indices = @transform_0, window_bounds = array<i64: 32, 128>}, {transform_indices = @transform_1, window_bounds = array<i64: 32, 128>}, {transform_indices = @transform_2, window_bounds = array<i64: 1, 5, 8, 128>}]} {
    %c0 = arith.constant 0 : index
    %c0_0 = arith.constant 0 : index
    %0 = vector.load %arg1[%c0, %c0_0] : memref<32x128xf32, #tpu.memory_space<vmem>>, vector<32x128xf32>
    %c0_1 = arith.constant 0 : index
    %c0_2 = arith.constant 0 : index
    %1 = vector.load %arg2[%c0_1, %c0_2] : memref<32x128xf32, #tpu.memory_space<vmem>>, vector<32x128xf32>
    %c0_i32 = arith.constant 0 : i32
    %2 = arith.cmpi eq, %arg0, %c0_i32 : i32
    %3 = arith.extui %2 : i1 to i32
    %c0_i32_3 = arith.constant 0 : i32
    %4 = arith.cmpi ne, %3, %c0_i32_3 : i32
    scf.if %4 {
      %8 = tpu.iota {dimensions = array<i32: 0>} : vector<32x128xi32>
      %c4_i32 = arith.constant 4 : i32
      %9 = vector.broadcast %c4_i32 : i32 to vector<32x128xi32>
      %10 = arith.cmpi slt, %8, %9 : vector<32x128xi32>
      %cst = arith.constant 0.000000e+00 : f32
      %11 = vector.broadcast %cst : f32 to vector<32x128xf32>
      %12 = arith.select %10, %0, %11 : vector<32x128xi1>, vector<32x128xf32>
      %cst_6 = arith.constant 0.000000e+00 : f32
      %13 = vector.broadcast %cst_6 : f32 to vector<32x128xf32>
      %14 = arith.select %10, %1, %13 : vector<32x128xi1>, vector<32x128xf32>
      %15 = math.log %12 : vector<32x128xf32>
      %cst_7 = arith.constant -1.000000e+02 : f32
      %16 = vector.broadcast %cst_7 : f32 to vector<32x128xf32>
      %17 = arith.maximumf %15, %16 : vector<32x128xf32>
      %cst_8 = arith.constant 0.000000e+00 : f32
      %18 = vector.broadcast %cst_8 : f32 to vector<32x128xf32>
      %19 = arith.subf %18, %12 : vector<32x128xf32>
      %20 = math.log1p %19 : vector<32x128xf32>
      %cst_9 = arith.constant -1.000000e+02 : f32
      %21 = vector.broadcast %cst_9 : f32 to vector<32x128xf32>
      %22 = arith.maximumf %20, %21 : vector<32x128xf32>
      %23 = arith.subf %17, %22 : vector<32x128xf32>
      %24 = arith.mulf %14, %23 : vector<32x128xf32>
      %25 = arith.addf %22, %24 : vector<32x128xf32>
      %26 = vector.shape_cast %14 : vector<32x128xf32> to vector<4x8x128xf32>
      %cst_10 = arith.constant dense<0.000000e+00> : vector<8x128xf32>
      %27 = vector.multi_reduction <add>, %26, %cst_10 [0] : vector<4x8x128xf32> to vector<8x128xf32>
      %c0_11 = arith.constant 0 : index
      %c0_12 = arith.constant 0 : index
      %c0_13 = arith.constant 0 : index
      %c0_14 = arith.constant 0 : index
      %28 = vector.load %arg3[%c0_11, %c0_12, %c0_13, %c0_14] : memref<1x5x8x128xf32, #tpu.memory_space<vmem>>, vector<1x1x8x128xf32>
      %29 = vector.shape_cast %28 : vector<1x1x8x128xf32> to vector<8x128xf32>
      %30 = vector.shape_cast %27 : vector<8x128xf32> to vector<1x1x8x128xf32>
      tpu.vector_store %arg3[%c0_11, %c0_12, %c0_13, %c0_14], %30 {strides = array<i32>} : memref<1x5x8x128xf32, #tpu.memory_space<vmem>>, vector<1x1x8x128xf32>,
      %31 = vector.shape_cast %12 : vector<32x128xf32> to vector<4x8x128xf32>
      %cst_15 = arith.constant dense<0.000000e+00> : vector<8x128xf32>
      %32 = vector.multi_reduction <add>, %31, %cst_15 [0] : vector<4x8x128xf32> to vector<8x128xf32>
      %c0_16 = arith.constant 0 : index
      %c1 = arith.constant 1 : index
      %c0_17 = arith.constant 0 : index
      %c0_18 = arith.constant 0 : index
      %33 = vector.load %arg3[%c0_16, %c1, %c0_17, %c0_18] : memref<1x5x8x128xf32, #tpu.memory_space<vmem>>, vector<1x1x8x128xf32>
      %34 = vector.shape_cast %33 : vector<1x1x8x128xf32> to vector<8x128xf32>
      %35 = vector.shape_cast %32 : vector<8x128xf32> to vector<1x1x8x128xf32>
      tpu.vector_store %arg3[%c0_16, %c1, %c0_17, %c0_18], %35 {strides = array<i32>} : memref<1x5x8x128xf32, #tpu.memory_space<vmem>>, vector<1x1x8x128xf32>,
      %36 = arith.mulf %12, %14 : vector<32x128xf32>
      %37 = vector.shape_cast %36 : vector<32x128xf32> to vector<4x8x128xf32>
      %cst_19 = arith.constant dense<0.000000e+00> : vector<8x128xf32>
      %38 = vector.multi_reduction <add>, %37, %cst_19 [0] : vector<4x8x128xf32> to vector<8x128xf32>
      %c0_20 = arith.constant 0 : index
      %c2 = arith.constant 2 : index
      %c0_21 = arith.constant 0 : index
      %c0_22 = arith.constant 0 : index
      %39 = vector.load %arg3[%c0_20, %c2, %c0_21, %c0_22] : memref<1x5x8x128xf32, #tpu.memory_space<vmem>>, vector<1x1x8x128xf32>
      %40 = vector.shape_cast %39 : vector<1x1x8x128xf32> to vector<8x128xf32>
      %41 = vector.shape_cast %38 : vector<8x128xf32> to vector<1x1x8x128xf32>
      tpu.vector_store %arg3[%c0_20, %c2, %c0_21, %c0_22], %41 {strides = array<i32>} : memref<1x5x8x128xf32, #tpu.memory_space<vmem>>, vector<1x1x8x128xf32>,
      %42 = vector.shape_cast %25 : vector<32x128xf32> to vector<4x8x128xf32>
      %cst_23 = arith.constant dense<0.000000e+00> : vector<8x128xf32>
      %43 = vector.multi_reduction <add>, %42, %cst_23 [0] : vector<4x8x128xf32> to vector<8x128xf32>
      %c0_24 = arith.constant 0 : index
      %c3 = arith.constant 3 : index
      %c0_25 = arith.constant 0 : index
      %c0_26 = arith.constant 0 : index
      %44 = vector.load %arg3[%c0_24, %c3, %c0_25, %c0_26] : memref<1x5x8x128xf32, #tpu.memory_space<vmem>>, vector<1x1x8x128xf32>
      %45 = vector.shape_cast %44 : vector<1x1x8x128xf32> to vector<8x128xf32>
      %46 = vector.shape_cast %43 : vector<8x128xf32> to vector<1x1x8x128xf32>
      tpu.vector_store %arg3[%c0_24, %c3, %c0_25, %c0_26], %46 {strides = array<i32>} : memref<1x5x8x128xf32, #tpu.memory_space<vmem>>, vector<1x1x8x128xf32>,
      %47 = arith.mulf %14, %25 : vector<32x128xf32>
      %48 = vector.shape_cast %47 : vector<32x128xf32> to vector<4x8x128xf32>
      %cst_27 = arith.constant dense<0.000000e+00> : vector<8x128xf32>
      %49 = vector.multi_reduction <add>, %48, %cst_27 [0] : vector<4x8x128xf32> to vector<8x128xf32>
      %c0_28 = arith.constant 0 : index
      %c4 = arith.constant 4 : index
      %c0_29 = arith.constant 0 : index
      %c0_30 = arith.constant 0 : index
      %50 = vector.load %arg3[%c0_28, %c4, %c0_29, %c0_30] : memref<1x5x8x128xf32, #tpu.memory_space<vmem>>, vector<1x1x8x128xf32>
      %51 = vector.shape_cast %50 : vector<1x1x8x128xf32> to vector<8x128xf32>
      %52 = vector.shape_cast %49 : vector<8x128xf32> to vector<1x1x8x128xf32>
      tpu.vector_store %arg3[%c0_28, %c4, %c0_29, %c0_30], %52 {strides = array<i32>} : memref<1x5x8x128xf32, #tpu.memory_space<vmem>>, vector<1x1x8x128xf32>,
    } else {
    }
    %c0_i32_4 = arith.constant 0 : i32
    %5 = arith.cmpi ne, %arg0, %c0_i32_4 : i32
    %6 = arith.extui %5 : i1 to i32
    %c0_i32_5 = arith.constant 0 : i32
    %7 = arith.cmpi ne, %6, %c0_i32_5 : i32
    scf.if %7 {
      %8 = math.log %0 : vector<32x128xf32>
      %cst = arith.constant -1.000000e+02 : f32
      %9 = vector.broadcast %cst : f32 to vector<32x128xf32>
      %10 = arith.maximumf %8, %9 : vector<32x128xf32>
      %cst_6 = arith.constant 0.000000e+00 : f32
      %11 = vector.broadcast %cst_6 : f32 to vector<32x128xf32>
      %12 = arith.subf %11, %0 : vector<32x128xf32>
      %13 = math.log1p %12 : vector<32x128xf32>
      %cst_7 = arith.constant -1.000000e+02 : f32
      %14 = vector.broadcast %cst_7 : f32 to vector<32x128xf32>
      %15 = arith.maximumf %13, %14 : vector<32x128xf32>
      %16 = arith.subf %10, %15 : vector<32x128xf32>
      %17 = arith.mulf %1, %16 : vector<32x128xf32>
      %18 = arith.addf %15, %17 : vector<32x128xf32>
      %19 = vector.shape_cast %1 : vector<32x128xf32> to vector<4x8x128xf32>
      %cst_8 = arith.constant dense<0.000000e+00> : vector<8x128xf32>
      %20 = vector.multi_reduction <add>, %19, %cst_8 [0] : vector<4x8x128xf32> to vector<8x128xf32>
      %c0_9 = arith.constant 0 : index
      %c0_10 = arith.constant 0 : index
      %c0_11 = arith.constant 0 : index
      %c0_12 = arith.constant 0 : index
      %21 = vector.load %arg3[%c0_9, %c0_10, %c0_11, %c0_12] : memref<1x5x8x128xf32, #tpu.memory_space<vmem>>, vector<1x1x8x128xf32>
      %22 = vector.shape_cast %21 : vector<1x1x8x128xf32> to vector<8x128xf32>
      %23 = vector.shape_cast %20 : vector<8x128xf32> to vector<1x1x8x128xf32>
      tpu.vector_store %arg3[%c0_9, %c0_10, %c0_11, %c0_12], %23 {strides = array<i32>} : memref<1x5x8x128xf32, #tpu.memory_space<vmem>>, vector<1x1x8x128xf32>,
      %24 = vector.shape_cast %0 : vector<32x128xf32> to vector<4x8x128xf32>
      %cst_13 = arith.constant dense<0.000000e+00> : vector<8x128xf32>
      %25 = vector.multi_reduction <add>, %24, %cst_13 [0] : vector<4x8x128xf32> to vector<8x128xf32>
      %c0_14 = arith.constant 0 : index
      %c1 = arith.constant 1 : index
      %c0_15 = arith.constant 0 : index
      %c0_16 = arith.constant 0 : index
      %26 = vector.load %arg3[%c0_14, %c1, %c0_15, %c0_16] : memref<1x5x8x128xf32, #tpu.memory_space<vmem>>, vector<1x1x8x128xf32>
      %27 = vector.shape_cast %26 : vector<1x1x8x128xf32> to vector<8x128xf32>
      %28 = vector.shape_cast %25 : vector<8x128xf32> to vector<1x1x8x128xf32>
      tpu.vector_store %arg3[%c0_14, %c1, %c0_15, %c0_16], %28 {strides = array<i32>} : memref<1x5x8x128xf32, #tpu.memory_space<vmem>>, vector<1x1x8x128xf32>,
      %29 = arith.mulf %0, %1 : vector<32x128xf32>
      %30 = vector.shape_cast %29 : vector<32x128xf32> to vector<4x8x128xf32>
      %cst_17 = arith.constant dense<0.000000e+00> : vector<8x128xf32>
      %31 = vector.multi_reduction <add>, %30, %cst_17 [0] : vector<4x8x128xf32> to vector<8x128xf32>
      %c0_18 = arith.constant 0 : index
      %c2 = arith.constant 2 : index
      %c0_19 = arith.constant 0 : index
      %c0_20 = arith.constant 0 : index
      %32 = vector.load %arg3[%c0_18, %c2, %c0_19, %c0_20] : memref<1x5x8x128xf32, #tpu.memory_space<vmem>>, vector<1x1x8x128xf32>
      %33 = vector.shape_cast %32 : vector<1x1x8x128xf32> to vector<8x128xf32>
      %34 = vector.shape_cast %31 : vector<8x128xf32> to vector<1x1x8x128xf32>
      tpu.vector_store %arg3[%c0_18, %c2, %c0_19, %c0_20], %34 {strides = array<i32>} : memref<1x5x8x128xf32, #tpu.memory_space<vmem>>, vector<1x1x8x128xf32>,
      %35 = vector.shape_cast %18 : vector<32x128xf32> to vector<4x8x128xf32>
      %cst_21 = arith.constant dense<0.000000e+00> : vector<8x128xf32>
      %36 = vector.multi_reduction <add>, %35, %cst_21 [0] : vector<4x8x128xf32> to vector<8x128xf32>
      %c0_22 = arith.constant 0 : index
      %c3 = arith.constant 3 : index
      %c0_23 = arith.constant 0 : index
      %c0_24 = arith.constant 0 : index
      %37 = vector.load %arg3[%c0_22, %c3, %c0_23, %c0_24] : memref<1x5x8x128xf32, #tpu.memory_space<vmem>>, vector<1x1x8x128xf32>
      %38 = vector.shape_cast %37 : vector<1x1x8x128xf32> to vector<8x128xf32>
      %39 = vector.shape_cast %36 : vector<8x128xf32> to vector<1x1x8x128xf32>
      tpu.vector_store %arg3[%c0_22, %c3, %c0_23, %c0_24], %39 {strides = array<i32>} : memref<1x5x8x128xf32, #tpu.memory_space<vmem>>, vector<1x1x8x128xf32>,
      %40 = arith.mulf %1, %18 : vector<32x128xf32>
      %41 = vector.shape_cast %40 : vector<32x128xf32> to vector<4x8x128xf32>
      %cst_25 = arith.constant dense<0.000000e+00> : vector<8x128xf32>
      %42 = vector.multi_reduction <add>, %41, %cst_25 [0] : vector<4x8x128xf32> to vector<8x128xf32>
      %c0_26 = arith.constant 0 : index
      %c4 = arith.constant 4 : index
      %c0_27 = arith.constant 0 : index
      %c0_28 = arith.constant 0 : index
      %43 = vector.load %arg3[%c0_26, %c4, %c0_27, %c0_28] : memref<1x5x8x128xf32, #tpu.memory_space<vmem>>, vector<1x1x8x128xf32>
      %44 = vector.shape_cast %43 : vector<1x1x8x128xf32> to vector<8x128xf32>
      %45 = vector.shape_cast %42 : vector<8x128xf32> to vector<1x1x8x128xf32>
      tpu.vector_store %arg3[%c0_26, %c4, %c0_27, %c0_28], %45 {strides = array<i32>} : memref<1x5x8x128xf32, #tpu.memory_space<vmem>>, vector<1x1x8x128xf32>,
    } else {
    }
    return
  }
  func.func @transform_0(%arg0: i32) -> (i32, i32) {
    %c0_i32 = arith.constant 0 : i32
    %c0_i32_0 = arith.constant 0 : i32
    return %arg0, %c0_i32 : i32, i32
  }
  func.func @transform_1(%arg0: i32) -> (i32, i32) {
    %c0_i32 = arith.constant 0 : i32
    %c0_i32_0 = arith.constant 0 : i32
    return %arg0, %c0_i32 : i32, i32
  }
  func.func @transform_2(%arg0: i32) -> (i32, i32, i32, i32) {
    %c0_i32 = arith.constant 0 : i32
    %c0_i32_0 = arith.constant 0 : i32
    %c0_i32_1 = arith.constant 0 : i32
    %c0_i32_2 = arith.constant 0 : i32
    return %arg0, %c0_i32, %c0_i32_0, %c0_i32_1 : i32, i32, i32, i32
  }
}

</mosaic_0001>

<llo_original>
// kernel: tpu_custom_call.1
$region0: #{tpu_custom_call.1}
  #allocation0 [shape = 'u32[]', space=smem, size = 0x4, offset = 0x4, fixed_abs, tag = 'smem constant byte address 0x4 - core index']
  #allocation1 [shape = 'u32[144,128]{1,0:T(1,128)}', space=vmem, size = 0x12000, scoped, tag = 'internal scratch']
  %s0 = inlined_call_operand.hbm [shape: f32[4,128], index: 0, kind: input, shape index: {}]
  %s1 = inlined_call_operand.hbm [shape: f32[4,128], index: 1, kind: input, shape index: {}]
  %s2 = inlined_call_operand.hbm [shape: f32[1,5,8,128], index: 2, kind: output, shape index: {}]
  %s3 = sld [smem:[#allocation0]]
  $region34: #{tpu_custom_call.1} parent=0
    _
  %s5 = ssub.s32 1, %s3
  %s6 = scalar_select 0, %s5, %s3
  $region1: #{tpu_custom_call.1} parent=0
    #allocation2 [shape = 'u8[16384]{0}', space=vmem, size = 0x4000, scoped, tag = 'input window, operand 0, single buffered']
    #allocation3 [shape = 's32[1]{0}', space=sflag, size = 0x4, scoped, tag = 'scoped memory for tpu_custom_call.1']
    #allocation4 [shape = 's32[1]{0}', space=sflag, size = 0x4, scoped, tag = 'scoped memory for tpu_custom_call.1']
    #allocation5 [shape = 'u8[16384]{0}', space=vmem, size = 0x4000, scoped, tag = 'input window, operand 1, single buffered']
    #allocation6 [shape = 's32[1]{0}', space=sflag, size = 0x4, scoped, tag = 'scoped memory for tpu_custom_call.1']
    #allocation7 [shape = 'u8[20480]{0}', space=vmem, size = 0x5000, scoped, tag = 'output window, operand 0, single buffered']
    %7 = vsyncpa [#allocation3], 0
    %8 = vsyncpa [#allocation6], 0
    %9 = vsyncpa [#allocation4], 0
    // Predicated region
    $region2: #{tpu_custom_call.1} parent=1 // pred_check
      _
    $region3: #{tpu_custom_call.1} parent=1 // pred_check_branch
      %11 = sbr.rel (0) target = $region5
    $region4: #{tpu_custom_call.1} parent=1 // pred_region
      %s13 = ssub.s32 512, 64
      %14 = vsyncadd [#allocation3], %s13
      %s15 = sshll.u32 [#allocation2], 4
      %s16 = int_to_ptr.vmem [resolvable:$true] %s15
      %21 = dma.hbm_to_vmem [thread:$0]  %s0, 64, %s16, [#allocation3], 64, 64, 4
    $region5: #{tpu_custom_call.1} parent=1 // pred_fallthru
      _
    // Predicated region
    $region6: #{tpu_custom_call.1} parent=1 // pred_check
      _
    $region7: #{tpu_custom_call.1} parent=1 // pred_check_branch
      %23 = sbr.rel (0) target = $region9
    $region8: #{tpu_custom_call.1} parent=1 // pred_region
      %s25 = ssub.s32 512, 64
      %26 = vsyncadd [#allocation6], %s25
      %s27 = sshll.u32 [#allocation5], 4
      %s28 = int_to_ptr.vmem [resolvable:$true] %s27
      %33 = dma.hbm_to_vmem [thread:$0]  %s1, 64, %s28, [#allocation6], 64, 64, 4
    $region9: #{tpu_custom_call.1} parent=1 // pred_fallthru
      _
    // Predicated region
    $region10: #{tpu_custom_call.1} parent=1 // pred_check
      _
    $region11: #{tpu_custom_call.1} parent=1 // pred_check_branch
      %35 = sbr.rel (0) target = $region13
    $region12: #{tpu_custom_call.1} parent=1 // pred_region
      %36 = dma.done [#allocation3], 512
    $region13: #{tpu_custom_call.1} parent=1 // pred_fallthru
      _
    // Predicated region
    $region14: #{tpu_custom_call.1} parent=1 // pred_check
      _
    $region15: #{tpu_custom_call.1} parent=1 // pred_check_branch
      %38 = sbr.rel (0) target = $region17
    $region16: #{tpu_custom_call.1} parent=1 // pred_region
      %39 = dma.done [#allocation6], 512
    $region17: #{tpu_custom_call.1} parent=1 // pred_fallthru
      _
    %v40 = vld [vmem:[#allocation2] sm:$0xff]
    %v41 = vld [vmem:[#allocation2 + $0x8] sm:$0xff]
    %v42 = vld [vmem:[#allocation2 + $0x10] sm:$0xff]
    %v43 = vld [vmem:[#allocation2 + $0x18] sm:$0xff]
    %v44 = vld [vmem:[#allocation5] sm:$0xff]
    %v45 = vld [vmem:[#allocation5 + $0x8] sm:$0xff]
    %v46 = vld [vmem:[#allocation5 + $0x10] sm:$0xff]
    %v47 = vld [vmem:[#allocation5 + $0x18] sm:$0xff]
    %p48 = scmp.eq.s32.totalorder 0, 0
    // Predicated region
    $region18: #{tpu_custom_call.1} parent=1 // pred_check
      %p49 = pneg %p48
    $region19: #{tpu_custom_call.1} parent=1 // pred_check_branch
      %51 = sbr.rel (%p49) target = $region21
    $region20: #{tpu_custom_call.1} parent=1 // pred_region
      %v52 = vlaneseq
      %v53 = vshrl.u32 %v52, 7
      %v54 = vadd.s32 %v53, 8
      %v55 = vadd.s32 %v53, 16
      %v56 = vadd.s32 %v53, 24
      %vm57 = vcmp.lt.s32.totalorder %v53, 4
      %vm58 = vcmp.lt.s32.totalorder %v54, 4
      %vm59 = vcmp.lt.s32.totalorder %v55, 4
      %vm60 = vcmp.lt.s32.totalorder %v56, 4
      %v61 = vsel %vm57, %v40, 0.0
      %v62 = vsel %vm58, %v41, 0.0
      %v63 = vsel %vm59, %v42, 0.0
      %v64 = vsel %vm60, %v43, 0.0
      %v65 = vsel %vm57, %v44, 0.0
      %v66 = vsel %vm58, %v45, 0.0
      %v67 = vsel %vm59, %v46, 0.0
      %v68 = vsel %vm60, %v47, 0.0
      %v69 = vlog2.pop %v61
      %v70 = vmul.f32 %v69, 0.6931472
      %v71 = vlog2.pop %v62
      %v72 = vmul.f32 %v71, 0.6931472
      %v73 = vlog2.pop %v63
      %v74 = vmul.f32 %v73, 0.6931472
      %v75 = vlog2.pop %v64
      %v76 = vmul.f32 %v75, 0.6931472
      %v77 = vmax.f32 %v70, -100.0
      %v78 = vmax.f32 %v72, -100.0
      %v79 = vmax.f32 %v74, -100.0
      %v80 = vmax.f32 %v76, -100.0
      %v81 = vsub.f32 0.0, %v61
      %v82 = vsub.f32 0.0, %v62
      %v83 = vsub.f32 0.0, %v63
      %v84 = vsub.f32 0.0, %v64
      %v85 = vadd.f32 %v81, 1.0
      %v86 = vlog2.pop %v85
      %v87 = vmul.f32 %v86, 0.6931472
      %v88 = vmul.f32 -0.5, %v81
      %v89 = vadd.f32 %v88, 1.0
      %v90 = vmul.f32 %v89, %v81
      %v91 = vand.u32 2147483647, %v81
      %vm92 = vcmp.lt.f32.partialorder %v91, 0.0004427343
      %v93 = vsel %vm92, %v90, %v87
      %v94 = vadd.f32 %v82, 1.0
      %v95 = vlog2.pop %v94
      %v96 = vmul.f32 %v95, 0.6931472
      %v97 = vmul.f32 -0.5, %v82
      %v98 = vadd.f32 %v97, 1.0
      %v99 = vmul.f32 %v98, %v82
      %v100 = vand.u32 2147483647, %v82
      %vm101 = vcmp.lt.f32.partialorder %v100, 0.0004427343
      %v102 = vsel %vm101, %v99, %v96
      %v103 = vadd.f32 %v83, 1.0
      %v104 = vlog2.pop %v103
      %v105 = vmul.f32 %v104, 0.6931472
      %v106 = vmul.f32 -0.5, %v83
      %v107 = vadd.f32 %v106, 1.0
      %v108 = vmul.f32 %v107, %v83
      %v109 = vand.u32 2147483647, %v83
      %vm110 = vcmp.lt.f32.partialorder %v109, 0.0004427343
      %v111 = vsel %vm110, %v108, %v105
      %v112 = vadd.f32 %v84, 1.0
      %v113 = vlog2.pop %v112
      %v114 = vmul.f32 %v113, 0.6931472
      %v115 = vmul.f32 -0.5, %v84
      %v116 = vadd.f32 %v115, 1.0
      %v117 = vmul.f32 %v116, %v84
      %v118 = vand.u32 2147483647, %v84
      %vm119 = vcmp.lt.f32.partialorder %v118, 0.0004427343
      %v120 = vsel %vm119, %v117, %v114
      %v121 = vmax.f32 %v93, -100.0
      %v122 = vmax.f32 %v102, -100.0
      %v123 = vmax.f32 %v111, -100.0
      %v124 = vmax.f32 %v120, -100.0
      %v125 = vsub.f32 %v77, %v121
      %v126 = vsub.f32 %v78, %v122
      %v127 = vsub.f32 %v79, %v123
      %v128 = vsub.f32 %v80, %v124
      %v129 = vmul.f32 %v65, %v125
      %v130 = vmul.f32 %v66, %v126
      %v131 = vmul.f32 %v67, %v127
      %v132 = vmul.f32 %v68, %v128
      %v133 = vadd.f32 %v121, %v129
      %v134 = vadd.f32 %v122, %v130
      %v135 = vadd.f32 %v123, %v131
      %v136 = vadd.f32 %v124, %v132
      %v137 = vadd.f32 %v65, %v66
      %v138 = vadd.f32 %v137, %v67
      %v139 = vadd.f32 %v138, %v68
      %140 = vst [vmem:[#allocation7] sm:$0xff] %v139
      %v141 = vadd.f32 %v61, %v62
      %v142 = vadd.f32 %v141, %v63
      %v143 = vadd.f32 %v142, %v64
      %s144 = scalar_lea.vmem [#allocation7], 8
      %145 = vst [vmem:[%s144] sm:$0xff] %v143
      %v146 = vmul.f32 %v61, %v65
      %v147 = vmul.f32 %v62, %v66
      %v148 = vmul.f32 %v63, %v67
      %v149 = vmul.f32 %v64, %v68
      %v150 = vadd.f32 %v146, %v147
      %v151 = vadd.f32 %v150, %v148
      %v152 = vadd.f32 %v151, %v149
      %s153 = scalar_lea.vmem [#allocation7], 16
      %154 = vst [vmem:[%s153] sm:$0xff] %v152
      %v155 = vadd.f32 %v133, %v134
      %v156 = vadd.f32 %v155, %v135
      %v157 = vadd.f32 %v156, %v136
      %s158 = scalar_lea.vmem [#allocation7], 24
      %159 = vst [vmem:[%s158] sm:$0xff] %v157
      %v160 = vmul.f32 %v65, %v133
      %v161 = vmul.f32 %v66, %v134
      %v162 = vmul.f32 %v67, %v135
      %v163 = vmul.f32 %v68, %v136
      %v164 = vadd.f32 %v160, %v161
      %v165 = vadd.f32 %v164, %v162
      %v166 = vadd.f32 %v165, %v163
      %s167 = scalar_lea.vmem [#allocation7], 32
      %168 = vst [vmem:[%s167] sm:$0xff] %v166
    $region21: #{tpu_custom_call.1} parent=1 // pred_fallthru
      _
    %p169 = scmp.ne.s32.totalorder 0, 0
    // Predicated region
    $region22: #{tpu_custom_call.1} parent=1 // pred_check
      %p170 = pneg %p169
    $region23: #{tpu_custom_call.1} parent=1 // pred_check_branch
      %172 = sbr.rel (%p170) target = $region25
    $region24: #{tpu_custom_call.1} parent=1 // pred_region
      %v173 = vlog2.pop %v40
      %v174 = vmul.f32 %v173, 0.6931472
      %v175 = vlog2.pop %v41
      %v176 = vmul.f32 %v175, 0.6931472
      %v177 = vlog2.pop %v42
      %v178 = vmul.f32 %v177, 0.6931472
      %v179 = vlog2.pop %v43
      %v180 = vmul.f32 %v179, 0.6931472
      %v181 = vmax.f32 %v174, -100.0
      %v182 = vmax.f32 %v176, -100.0
      %v183 = vmax.f32 %v178, -100.0
      %v184 = vmax.f32 %v180, -100.0
      %v185 = vsub.f32 0.0, %v40
      %v186 = vsub.f32 0.0, %v41
      %v187 = vsub.f32 0.0, %v42
      %v188 = vsub.f32 0.0, %v43
      %v189 = vadd.f32 %v185, 1.0
      %v190 = vlog2.pop %v189
      %v191 = vmul.f32 %v190, 0.6931472
      %v192 = vmul.f32 -0.5, %v185
      %v193 = vadd.f32 %v192, 1.0
      %v194 = vmul.f32 %v193, %v185
      %v195 = vand.u32 2147483647, %v185
      %vm196 = vcmp.lt.f32.partialorder %v195, 0.0004427343
      %v197 = vsel %vm196, %v194, %v191
      %v198 = vadd.f32 %v186, 1.0
      %v199 = vlog2.pop %v198
      %v200 = vmul.f32 %v199, 0.6931472
      %v201 = vmul.f32 -0.5, %v186
      %v202 = vadd.f32 %v201, 1.0
      %v203 = vmul.f32 %v202, %v186
      %v204 = vand.u32 2147483647, %v186
      %vm205 = vcmp.lt.f32.partialorder %v204, 0.0004427343
      %v206 = vsel %vm205, %v203, %v200
      %v207 = vadd.f32 %v187, 1.0
      %v208 = vlog2.pop %v207
      %v209 = vmul.f32 %v208, 0.6931472
      %v210 = vmul.f32 -0.5, %v187
      %v211 = vadd.f32 %v210, 1.0
      %v212 = vmul.f32 %v211, %v187
      %v213 = vand.u32 2147483647, %v187
      %vm214 = vcmp.lt.f32.partialorder %v213, 0.0004427343
      %v215 = vsel %vm214, %v212, %v209
      %v216 = vadd.f32 %v188, 1.0
      %v217 = vlog2.pop %v216
      %v218 = vmul.f32 %v217, 0.6931472
      %v219 = vmul.f32 -0.5, %v188
      %v220 = vadd.f32 %v219, 1.0
      %v221 = vmul.f32 %v220, %v188
      %v222 = vand.u32 2147483647, %v188
      %vm223 = vcmp.lt.f32.partialorder %v222, 0.0004427343
      %v224 = vsel %vm223, %v221, %v218
      %v225 = vmax.f32 %v197, -100.0
      %v226 = vmax.f32 %v206, -100.0
      %v227 = vmax.f32 %v215, -100.0
      %v228 = vmax.f32 %v224, -100.0
      %v229 = vsub.f32 %v181, %v225
      %v230 = vsub.f32 %v182, %v226
      %v231 = vsub.f32 %v183, %v227
      %v232 = vsub.f32 %v184, %v228
      %v233 = vmul.f32 %v44, %v229
      %v234 = vmul.f32 %v45, %v230
      %v235 = vmul.f32 %v46, %v231
      %v236 = vmul.f32 %v47, %v232
      %v237 = vadd.f32 %v225, %v233
      %v238 = vadd.f32 %v226, %v234
      %v239 = vadd.f32 %v227, %v235
      %v240 = vadd.f32 %v228, %v236
      %v241 = vadd.f32 %v44, %v45
      %v242 = vadd.f32 %v241, %v46
      %v243 = vadd.f32 %v242, %v47
      %244 = vst [vmem:[#allocation7] sm:$0xff] %v243
      %v245 = vadd.f32 %v40, %v41
      %v246 = vadd.f32 %v245, %v42
      %v247 = vadd.f32 %v246, %v43
      %s248 = scalar_lea.vmem [#allocation7], 8
      %249 = vst [vmem:[%s248] sm:$0xff] %v247
      %v250 = vmul.f32 %v40, %v44
      %v251 = vmul.f32 %v41, %v45
      %v252 = vmul.f32 %v42, %v46
      %v253 = vmul.f32 %v43, %v47
      %v254 = vadd.f32 %v250, %v251
      %v255 = vadd.f32 %v254, %v252
      %v256 = vadd.f32 %v255, %v253
      %s257 = scalar_lea.vmem [#allocation7], 16
      %258 = vst [vmem:[%s257] sm:$0xff] %v256
      %v259 = vadd.f32 %v237, %v238
      %v260 = vadd.f32 %v259, %v239
      %v261 = vadd.f32 %v260, %v240
      %s262 = scalar_lea.vmem [#allocation7], 24
      %263 = vst [vmem:[%s262] sm:$0xff] %v261
      %v264 = vmul.f32 %v44, %v237
      %v265 = vmul.f32 %v45, %v238
      %v266 = vmul.f32 %v46, %v239
      %v267 = vmul.f32 %v47, %v240
      %v268 = vadd.f32 %v264, %v265
      %v269 = vadd.f32 %v268, %v266
      %v270 = vadd.f32 %v269, %v267
      %s271 = scalar_lea.vmem [#allocation7], 32
      %272 = vst [vmem:[%s271] sm:$0xff] %v270
    $region25: #{tpu_custom_call.1} parent=1 // pred_fallthru
      _
    // Predicated region
    $region26: #{tpu_custom_call.1} parent=1 // pred_check
      _
    $region27: #{tpu_custom_call.1} parent=1 // pred_check_branch
      %274 = sbr.rel (0) target = $region29
    $region28: #{tpu_custom_call.1} parent=1 // pred_region
      %s276 = ssub.s32 640, 640
      %277 = vsyncadd [#allocation4], %s276
      %s278 = sshll.u32 [#allocation7], 4
      %s279 = int_to_ptr.vmem [resolvable:$true] %s278
      %284 = dma.vmem_to_hbm [thread:$0]  %s279, 640, %s2, [#allocation4], 128, 128, 8
    $region29: #{tpu_custom_call.1} parent=1 // pred_fallthru
      _
    // Predicated region
    $region30: #{tpu_custom_call.1} parent=1 // pred_check
      _
    $region31: #{tpu_custom_call.1} parent=1 // pred_check_branch
      %286 = sbr.rel (0) target = $region33
    $region32: #{tpu_custom_call.1} parent=1 // pred_region
      %287 = dma.done [#allocation4], 640
    $region33: #{tpu_custom_call.1} parent=1 // pred_fallthru
      _
    %288 = vsyncpa [#allocation3], 1
    %289 = vsyncpa [#allocation6], 1
    %290 = vsyncpa [#allocation4], 1

</llo_original>
